<compile_context>
chip_gen: v7x
topology: tpu7x:2x2x1
jax: 0.10.0
libtpu: 0.0.40
codegen_flags: <defaults>
</compile_context>

<pallas_src>
from functools import lru_cache

import numpy as np
import jax
import jax.numpy as jnp
from jax.experimental import pallas as pl
from jax.experimental.pallas import tpu as pltpu

LEVEL = 3
_FILT_LEN = 12
_PREC = jax.lax.Precision.HIGHEST  # see precision note in the header

# -------------------------- db6 wavelet filters -----------------------------
# pywt Wavelet('db6').rec_lo  (sum == sqrt(2))
_DB6_REC_LO = np.array([
    0.11154074335008017, 0.4946238903983854, 0.7511339080215775,
    0.3152503517092432, -0.22626469396516913, -0.12976686756709563,
    0.09750160558707936, 0.02752286553001629, -0.031582039318031156,
    0.0005538422009938016, 0.004777257511010651, -0.00107730108499558,
], dtype=np.float64)


def _db6_filters_np():
    rec_lo = _DB6_REC_LO
    dec_lo = rec_lo[::-1]
    rec_hi = np.array([((-1.0) ** i) * dec_lo[i] for i in range(len(dec_lo))])
    dec_hi = rec_hi[::-1]
    # pytorch_wavelets analysis uses time-reversed dec filters with
    # cross-correlation (F.conv2d); synthesis uses rec filters unreversed.
    h0 = dec_lo[::-1]   # analysis low-pass (x-corr form)
    h1 = dec_hi[::-1]   # analysis high-pass (x-corr form)
    g0 = rec_lo         # synthesis low-pass
    g1 = rec_hi         # synthesis high-pass
    return h0, h1, g0, g1


# ------------- banded DWT/IDWT matrices (symmetric padding folded in) -------
@lru_cache(maxsize=None)
def _analysis_mat(N):
    """Acat (2*outsize, N): [lo ; hi] = Acat @ x along the axis (one matmul)."""
    h0, h1, _, _ = _db6_filters_np()
    L = _FILT_LEN
    outsize = (N + L - 1) // 2                       # pywt.dwt_coeff_len
    p = 2 * (outsize - 1) - N + L
    idx = np.pad(np.arange(N), (p // 2, (p + 1) // 2), mode="symmetric")
    A = np.zeros((2, outsize, N), np.float64)
    for o in range(outsize):
        for k in range(L):
            A[0, o, idx[2 * o + k]] += h0[k]
            A[1, o, idx[2 * o + k]] += h1[k]
    return jnp.asarray(A.reshape(2 * outsize, N), jnp.float32)


@lru_cache(maxsize=None)
def _synthesis_mat(N):
    """Scat (out_len, 2*N): y = Scat @ [lo ; hi] along the axis (one matmul)."""
    _, _, g0, g1 = _db6_filters_np()
    L = _FILT_LEN
    out_len = 2 * N - L + 2
    S = np.zeros((out_len, 2, N), np.float64)
    for m in range(out_len):
        for n in range(N):
            k = m + (L - 2) - 2 * n
            if 0 <= k < L:
                S[m, 0, n] = g0[k]
                S[m, 1, n] = g1[k]
    return jnp.asarray(S.reshape(out_len, 2 * N), jnp.float32)


# --------------------- batched (quadrant-block) DWT / IDWT -------------------
def _dwt_level_block(ll):
    """One 2-D analysis level -> quadrant block (B, C, 2*Ho, 2*Wo):
       [:Ho,:Wo]=LL  [Ho:,:Wo]=b0  [:Ho,Wo:]=b1  [Ho:,Wo:]=b2."""
    H, W = ll.shape[-2], ll.shape[-1]
    AW = _analysis_mat(W)                                       # (2*Wo, W)
    AH = _analysis_mat(H)                                       # (2*Ho, H)
    # row pass: contract the MINOR dim W, lo & hi in one matmul
    r = jnp.einsum("bchw,ow->bcho", ll, AW, precision=_PREC)    # (B,C,H,2Wo)
    # column pass: transpose H<->W once so the contraction stays on the minor
    # dim (no XLA relayout), again lo & hi in one matmul.
    rT = jnp.swapaxes(r, -1, -2)                                # (B,C,2Wo,H)
    cT = jnp.einsum("bcwh,ph->bcwp", rT, AH, precision=_PREC)   # (B,C,2Wo,2Ho)
    return jnp.swapaxes(cT, -1, -2)                             # (B,C,2Ho,2Wo)


def _idwt_level_block(block):
    """One 2-D synthesis level from a quadrant block (inverse of above)."""
    Ho = block.shape[-2] // 2
    Wo = block.shape[-1] // 2
    SH = _synthesis_mat(Ho)                                     # (Hout, 2*Ho)
    SW = _synthesis_mat(Wo)                                     # (Wout, 2*Wo)
    # column synthesis (contract the 2*Ho axis, kept on the minor dim)
    bT = jnp.swapaxes(block, -1, -2)                            # (B,C,2Wo,2Ho)
    tT = jnp.einsum("bcwn,mn->bcwm", bT, SH, precision=_PREC)   # (B,C,2Wo,Hout)
    t = jnp.swapaxes(tT, -1, -2)                                # (B,C,Hout,2Wo)
    # row synthesis (minor-dim contraction)
    return jnp.einsum("bchn,qn->bchq", t, SW, precision=_PREC)  # (B,C,Hout,Wout)


def dwt2d_blocks(x, J):
    """x: (B,C,H,W) -> (yh_untouched, last_block).

    yh_untouched: [yh_1 .. yh_{J-1}], yh_j: (B, C, 3, Hj, Wj)  (pass-through)
    last_block:   (B, C, 2*mJ1, 2*mJ2) quadrant block of the level-J coeffs,
                  consumed directly by the Pallas channel-mix kernel.
    """
    yh = []
    ll = x
    for j in range(J):
        block = _dwt_level_block(ll)
        if j == J - 1:
            return yh, block
        Ho, Wo = block.shape[-2] // 2, block.shape[-1] // 2
        ll = block[..., :Ho, :Wo]
        yh.append(jnp.stack([block[..., Ho:, :Wo],    # band index 0
                             block[..., :Ho, Wo:],    # band index 1
                             block[..., Ho:, Wo:]],   # band index 2
                            axis=2))
    raise ValueError("J must be >= 1")


def idwt2d_from_block(block, yh):
    """Inverse transform.  `block` is the (channel-mixed) level-J quadrant
    block; `yh` are the untouched finer-level coefficient stacks."""
    ll = _idwt_level_block(block)
    for h in yh[::-1]:
        if ll.shape[-2] > h.shape[-2]:
            ll = ll[..., :-1, :]
        if ll.shape[-1] > h.shape[-1]:
            ll = ll[..., :-1]
        b0, b1, b2 = h[:, :, 0], h[:, :, 1], h[:, :, 2]
        top = jnp.concatenate([ll, b1], axis=-1)
        bot = jnp.concatenate([b0, b2], axis=-1)
        ll = _idwt_level_block(jnp.concatenate([top, bot], axis=-2))
    return ll


# ----------------- slice-based reference DWT/IDWT (for checks) --------------
def _afb1d_ref(x, h0, h1, axis):
    N = x.shape[axis]
    L = int(h0.shape[0])
    outsize = (N + L - 1) // 2
    p = 2 * (outsize - 1) - N + L
    pad = [(0, 0)] * x.ndim
    pad[axis] = (p // 2, (p + 1) // 2)
    xp = jnp.pad(x, pad, mode="symmetric")

    def corr(h):
        acc = None
        for k in range(L):
            sl = [slice(None)] * x.ndim
            sl[axis] = slice(k, k + 2 * (outsize - 1) + 1, 2)
            term = h[k] * xp[tuple(sl)]
            acc = term if acc is None else acc + term
        return acc

    return corr(h0), corr(h1)


def _sfb1d_ref(lo, hi, g0, g1, axis):
    N = lo.shape[axis]
    L = int(g0.shape[0])
    full = 2 * N + L - 2
    out_len = 2 * N - L + 2
    shape = list(lo.shape)
    shape[axis] = full
    y = jnp.zeros(shape, lo.dtype)
    for k in range(L):
        sl = [slice(None)] * lo.ndim
        sl[axis] = slice(k, k + 2 * N, 2)
        y = y.at[tuple(sl)].add(g0[k] * lo + g1[k] * hi)
    sl = [slice(None)] * lo.ndim
    sl[axis] = slice(L - 2, L - 2 + out_len)
    return y[tuple(sl)]


def dwt2d_ref(x, J, h0, h1):
    yh = []
    ll = x
    for _ in range(J):
        lo_r, hi_r = _afb1d_ref(ll, h0, h1, axis=3)
        ll_new, b0 = _afb1d_ref(lo_r, h0, h1, axis=2)
        b1, b2 = _afb1d_ref(hi_r, h0, h1, axis=2)
        yh.append(jnp.stack([b0, b1, b2], axis=2))
        ll = ll_new
    return ll, yh


def idwt2d_ref(yl, yh, g0, g1):
    ll = yl
    for h in yh[::-1]:
        if ll.shape[-2] > h.shape[-2]:
            ll = ll[..., :-1, :]
        if ll.shape[-1] > h.shape[-1]:
            ll = ll[..., :-1]
        b0, b1, b2 = h[:, :, 0], h[:, :, 1], h[:, :, 2]
        lo = _sfb1d_ref(ll, b0, g0, g1, axis=2)
        hi = _sfb1d_ref(b1, b2, g0, g1, axis=2)
        ll = _sfb1d_ref(lo, hi, g0, g1, axis=3)
    return ll


# --------------------- Pallas channel-mix kernel -----------------------------
def _chan_mix_kernel(x_ref, w_ref, o_ref):
    """out[b, o, p, q] = sum_i x[b, i, p, q] * w[i, o, p, q].

    Unrolled f32 FMA chain over Ci: avoids materialising the rank-5
    (B, Ci, Co, P1, P2) broadcast product (sublane / vreg waste)."""
    x = x_ref[...]                       # (B, Ci, P1, P2)
    w = w_ref[...]                       # (Ci, Co, P1, P2)
    ci = w.shape[0]
    acc = x[:, 0:1] * w[0:1]             # (B,1,P1,P2)*(1,Co,P1,P2)->(B,Co,P1,P2)
    for i in range(1, ci):
        acc = acc + x[:, i:i + 1] * w[i:i + 1]
    o_ref[...] = acc


def chan_mix_pallas(x_block, w_block):
    """x_block: (B, Ci, P1, P2), w_block: (Ci, Co, P1, P2) -> (B, Co, P1, P2).

    Single-step invocation: the whole coefficient block lives in VMEM, so
    there is no per-grid-step pipeline overhead and no megacore sharding
    (pointless at ~100 KB of work).
    # NOTE(scale-up / v7x): at production channel counts (e.g. Ci=Co=64) keep
    # a band axis in the grid, add a lane-tile axis (>=512 lanes per tile) and
    # set pltpu.CompilerParams(vmem_limit_bytes=...) with 2x double-buffering
    # headroom so the blocks stay under v7x's 64 MiB physical VMEM.
    """
    B, Ci, P1, P2 = x_block.shape
    Co = w_block.shape[1]
    return pl.pallas_call(
        _chan_mix_kernel,
        out_shape=jax.ShapeDtypeStruct((B, Co, P1, P2), jnp.float32),
        grid=(1,),
        # Whole-array blocks (last-two dims equal the full array dims, which
        # is legal regardless of (8,128) alignment).
        in_specs=[pl.BlockSpec((B, Ci, P1, P2), lambda i: (0, 0, 0, 0)),
                  pl.BlockSpec((Ci, Co, P1, P2), lambda i: (0, 0, 0, 0))],
        out_specs=pl.BlockSpec((B, Co, P1, P2), lambda i: (0, 0, 0, 0)),
        compiler_params=pltpu.CompilerParams(
            dimension_semantics=("arbitrary",)),
    )(x_block, w_block)


# ------------------------------ WaveConv2d -----------------------------------
class WaveConv2d:
    def __init__(self, in_channels, out_channels, level, dummy, key):
        self.in_channels = in_channels
        self.out_channels = out_channels
        self.level = level

        # modes = spatial size of the level-J LL band of `dummy`
        # (same as running DWT(J=level)(dummy) in the PyTorch module).
        _, dummy_block = dwt2d_blocks(jnp.asarray(dummy, jnp.float32), level)
        self.modes1 = int(dummy_block.shape[-2]) // 2
        self.modes2 = int(dummy_block.shape[-1]) // 2
        m1, m2 = self.modes1, self.modes2

        scale = 1.0 / (in_channels * out_channels)
        shape = (in_channels, out_channels, m1, m2)
        ks = jax.random.split(key, 4)
        # deterministic init: scale * U[0,1), same distribution as torch.rand
        self.weights1 = scale * jax.random.uniform(ks[0], shape, jnp.float32)
        self.weights2 = scale * jax.random.uniform(ks[1], shape, jnp.float32)
        self.weights3 = scale * jax.random.uniform(ks[2], shape, jnp.float32)
        self.weights4 = scale * jax.random.uniform(ks[3], shape, jnp.float32)

        # Assemble the four weight tensors ONCE at init into the same 2x2
        # quadrant-block layout the level-J coefficients are kept in:
        #   [[ w1 (LL)     , w3 (band 1) ],
        #    [ w2 (band 0) , w4 (band 2) ]]
        # so the Pallas kernel is a single elementwise channel mix over the
        # whole block and no per-call weight re-layout / HBM copy is needed.
        top = jnp.concatenate([self.weights1, self.weights3], axis=-1)
        bot = jnp.concatenate([self.weights2, self.weights4], axis=-1)
        self.w_block = jnp.concatenate([top, bot], axis=-2)  # (Ci,Co,2m1,2m2)

    def __call__(self, x):
        x = x.astype(jnp.float32)
        # DWT: untouched finer levels + the level-J coefficients as one block.
        yh, block = dwt2d_blocks(x, self.level)
        # Channel mixing of LL + 3 detail bands in ONE Pallas call, zero
        # layout plumbing around it.
        mixed = chan_mix_pallas(block, self.w_block)
        # IDWT consumes the mixed block directly (no slicing / stacking).
        return idwt2d_from_block(mixed, yh)


# --------------------------------- main ---------------------------------------
if __name__ == "__main__":
    key = jax.random.PRNGKey(0)
    k_x, k_w = jax.random.split(key)

    B, C, H, W = 2, 4, 16, 16
    dummy = jnp.zeros((1, C, H, W), jnp.float32)
    module = WaveConv2d(C, C, LEVEL, dummy, k_w)

    x = jax.random.normal(k_x, (B, C, H, W), jnp.float32)

    fwd = jax.jit(module.__call__)
    y = jax.block_until_ready(fwd(x))
    assert y.shape == (B, C, H, W), y.shape

    # ---- end-to-end check vs slice-based DWT/IDWT + einsum channel-mix ------
    h0, h1, g0, g1 = [jnp.asarray(f, jnp.float32) for f in _db6_filters_np()]
    x_ft_r, x_coeff_r = dwt2d_ref(x, LEVEL, h0, h1)
    ws = [module.weights1, module.weights2, module.weights3, module.weights4]
    out_ft_r = jnp.einsum("bixy,ioxy->boxy", x_ft_r, ws[0], precision=_PREC)
    new_r = jnp.stack(
        [jnp.einsum("bixy,ioxy->boxy", x_coeff_r[-1][:, :, k], ws[k + 1],
                    precision=_PREC) for k in range(3)], axis=2)
    y_ref = idwt2d_ref(out_ft_r, list(x_coeff_r[:-1]) + [new_r], g0, g1)
    err = float(np.max(np.abs(np.asarray(y) - np.asarray(y_ref))))
    assert np.allclose(np.asarray(y), np.asarray(y_ref), atol=1e-4, rtol=1e-3), err

    # ---- direct Pallas-vs-einsum check on the channel mixing ----------------
    yh_m, blk = dwt2d_blocks(x, LEVEL)
    mixed = jax.block_until_ready(chan_mix_pallas(blk, module.w_block))
    m1, m2 = module.modes1, module.modes2
    quads = [((slice(0, m1), slice(0, m2)), module.weights1),
             ((slice(m1, 2 * m1), slice(0, m2)), module.weights2),
             ((slice(0, m1), slice(m2, 2 * m2)), module.weights3),
             ((slice(m1, 2 * m1), slice(m2, 2 * m2)), module.weights4)]
    for (rs, cs), wq in quads:
        refq = jnp.einsum("bixy,ioxy->boxy", blk[..., rs, cs], wq,
                          precision=_PREC)
        assert np.allclose(np.asarray(mixed[..., rs, cs]), np.asarray(refq),
                           atol=1e-5, rtol=1e-5)

    print("KERNEL_OK")
</pallas_src>

<mosaic_0001>
module attributes {stable_mosaic.version = 11 : i64} {
  func.func @_chan_mix_kernel(%arg0: i32, %arg1: memref<2x4x22x22xf32, #tpu.memory_space<vmem>>, %arg2: memref<4x4x22x22xf32, #tpu.memory_space<vmem>>, %arg3: memref<2x4x22x22xf32, #tpu.memory_space<vmem>>) attributes {dimension_semantics = [#tpu.dimension_semantics<arbitrary>], iteration_bounds = array<i64: 1>, scalar_prefetch = 0 : i64, scratch_operands = 0 : i64, tpu.core_type = #tpu.core_type<tc>, window_params = [{pipeline_mode = #tpu.pipeline_mode<synchronous>, transform_indices = @transform_0, window_bounds = array<i64: 2, 4, 22, 22>}, {pipeline_mode = #tpu.pipeline_mode<synchronous>, transform_indices = @transform_1, window_bounds = array<i64: 4, 4, 22, 22>}, {pipeline_mode = #tpu.pipeline_mode<synchronous>, transform_indices = @transform_2, window_bounds = array<i64: 2, 4, 22, 22>}]} {
    %c0 = arith.constant 0 : index
    %c0_0 = arith.constant 0 : index
    %c0_1 = arith.constant 0 : index
    %c0_2 = arith.constant 0 : index
    %0 = vector.load %arg1[%c0, %c0_0, %c0_1, %c0_2] : memref<2x4x22x22xf32, #tpu.memory_space<vmem>>, vector<2x4x22x22xf32>
    %c0_3 = arith.constant 0 : index
    %c0_4 = arith.constant 0 : index
    %c0_5 = arith.constant 0 : index
    %c0_6 = arith.constant 0 : index
    %1 = vector.load %arg2[%c0_3, %c0_4, %c0_5, %c0_6] : memref<4x4x22x22xf32, #tpu.memory_space<vmem>>, vector<4x4x22x22xf32>
    %2 = vector.extract_strided_slice %0 {offsets = [0, 0, 0, 0], sizes = [2, 1, 22, 22], strides = [1, 1, 1, 1]} : vector<2x4x22x22xf32> to vector<2x1x22x22xf32>
    %3 = vector.extract_strided_slice %1 {offsets = [0, 0, 0, 0], sizes = [1, 4, 22, 22], strides = [1, 1, 1, 1]} : vector<4x4x22x22xf32> to vector<1x4x22x22xf32>
    %4 = vector.broadcast %2 : vector<2x1x22x22xf32> to vector<2x4x22x22xf32>
    %5 = vector.broadcast %3 : vector<1x4x22x22xf32> to vector<2x4x22x22xf32>
    %6 = arith.mulf %4, %5 : vector<2x4x22x22xf32>
    %7 = vector.extract_strided_slice %0 {offsets = [0, 1, 0, 0], sizes = [2, 1, 22, 22], strides = [1, 1, 1, 1]} : vector<2x4x22x22xf32> to vector<2x1x22x22xf32>
    %8 = vector.extract_strided_slice %1 {offsets = [1, 0, 0, 0], sizes = [1, 4, 22, 22], strides = [1, 1, 1, 1]} : vector<4x4x22x22xf32> to vector<1x4x22x22xf32>
    %9 = vector.broadcast %7 : vector<2x1x22x22xf32> to vector<2x4x22x22xf32>
    %10 = vector.broadcast %8 : vector<1x4x22x22xf32> to vector<2x4x22x22xf32>
    %11 = arith.mulf %9, %10 : vector<2x4x22x22xf32>
    %12 = arith.addf %6, %11 : vector<2x4x22x22xf32>
    %13 = vector.extract_strided_slice %0 {offsets = [0, 2, 0, 0], sizes = [2, 1, 22, 22], strides = [1, 1, 1, 1]} : vector<2x4x22x22xf32> to vector<2x1x22x22xf32>
    %14 = vector.extract_strided_slice %1 {offsets = [2, 0, 0, 0], sizes = [1, 4, 22, 22], strides = [1, 1, 1, 1]} : vector<4x4x22x22xf32> to vector<1x4x22x22xf32>
    %15 = vector.broadcast %13 : vector<2x1x22x22xf32> to vector<2x4x22x22xf32>
    %16 = vector.broadcast %14 : vector<1x4x22x22xf32> to vector<2x4x22x22xf32>
    %17 = arith.mulf %15, %16 : vector<2x4x22x22xf32>
    %18 = arith.addf %12, %17 : vector<2x4x22x22xf32>
    %19 = vector.extract_strided_slice %0 {offsets = [0, 3, 0, 0], sizes = [2, 1, 22, 22], strides = [1, 1, 1, 1]} : vector<2x4x22x22xf32> to vector<2x1x22x22xf32>
    %20 = vector.extract_strided_slice %1 {offsets = [3, 0, 0, 0], sizes = [1, 4, 22, 22], strides = [1, 1, 1, 1]} : vector<4x4x22x22xf32> to vector<1x4x22x22xf32>
    %21 = vector.broadcast %19 : vector<2x1x22x22xf32> to vector<2x4x22x22xf32>
    %22 = vector.broadcast %20 : vector<1x4x22x22xf32> to vector<2x4x22x22xf32>
    %23 = arith.mulf %21, %22 : vector<2x4x22x22xf32>
    %24 = arith.addf %18, %23 : vector<2x4x22x22xf32>
    %c0_7 = arith.constant 0 : index
    %c0_8 = arith.constant 0 : index
    %c0_9 = arith.constant 0 : index
    %c0_10 = arith.constant 0 : index
    %25 = vector.load %arg3[%c0_7, %c0_8, %c0_9, %c0_10] : memref<2x4x22x22xf32, #tpu.memory_space<vmem>>, vector<2x4x22x22xf32>
    tpu.vector_store %arg3[%c0_7, %c0_8, %c0_9, %c0_10], %24 {strides = array<i32>} : memref<2x4x22x22xf32, #tpu.memory_space<vmem>>, vector<2x4x22x22xf32>,
    return
  }
  func.func @transform_0(%arg0: i32) -> (i32, i32, i32, i32) {
    %c0_i32 = arith.constant 0 : i32
    %c0_i32_0 = arith.constant 0 : i32
    %c0_i32_1 = arith.constant 0 : i32
    %c0_i32_2 = arith.constant 0 : i32
    %c0_i32_3 = arith.constant 0 : i32
    return %c0_i32, %c0_i32_0, %c0_i32_1, %c0_i32_2 : i32, i32, i32, i32
  }
  func.func @transform_1(%arg0: i32) -> (i32, i32, i32, i32) {
    %c0_i32 = arith.constant 0 : i32
    %c0_i32_0 = arith.constant 0 : i32
    %c0_i32_1 = arith.constant 0 : i32
    %c0_i32_2 = arith.constant 0 : i32
    %c0_i32_3 = arith.constant 0 : i32
    return %c0_i32, %c0_i32_0, %c0_i32_1, %c0_i32_2 : i32, i32, i32, i32
  }
  func.func @transform_2(%arg0: i32) -> (i32, i32, i32, i32) {
    %c0_i32 = arith.constant 0 : i32
    %c0_i32_0 = arith.constant 0 : i32
    %c0_i32_1 = arith.constant 0 : i32
    %c0_i32_2 = arith.constant 0 : i32
    %c0_i32_3 = arith.constant 0 : i32
    return %c0_i32, %c0_i32_0, %c0_i32_1, %c0_i32_2 : i32, i32, i32, i32
  }
}

</mosaic_0001>

<llo_original>
// kernel: a_call__.1
$region0: #{a_call__.1}
  #allocation0 [shape = 'u32[]', space=smem, size = 0x4, offset = 0x4, fixed_abs, tag = 'smem constant byte address 0x4 - core index']
  #allocation1 [shape = 'u32[144,128]{1,0:T(1,128)}', space=vmem, size = 0x12000, scoped, tag = 'internal scratch']
  %s0 = inlined_call_operand.vmem [shape: f32[2,4,22,22], index: 0, kind: input, shape index: {}]
  %s1 = inlined_call_operand.vmem [shape: f32[4,4,22,22], index: 1, kind: input, shape index: {}]
  %s2 = inlined_call_operand.vmem [shape: f32[2,4,22,22], index: 2, kind: output, shape index: {}]
  %s3 = sld [smem:[#allocation0]]
  $region18: #{a_call__.1} parent=0
    _
  %s5 = ssub.s32 1, %s3
  %s6 = scalar_select 0, %s5, %s3
  // Predicated region
  $region2: #{a_call__.1} parent=0 // pred_check
    _
  $region3: #{a_call__.1} parent=0 // pred_check_branch
    %8 = sbr.rel (0) target = $region5
  $region4: #{a_call__.1} parent=0 // pred_region
    _
  $region5: #{a_call__.1} parent=0 // pred_fallthru
    _
  // Predicated region
  $region6: #{a_call__.1} parent=0 // pred_check
    _
  $region7: #{a_call__.1} parent=0 // pred_check_branch
    %10 = sbr.rel (0) target = $region9
  $region8: #{a_call__.1} parent=0 // pred_region
    _
  $region9: #{a_call__.1} parent=0 // pred_fallthru
    _
  %v11 = vld [vmem:[%s0] sm:$0xff]
  %v12 = vld [vmem:[%s0 + $0x8] sm:$0xff]
  %v13 = vld [vmem:[%s0 + $0x10] sm:$0x3f]
  %v14 = vld [vmem:[%s0 + $0x18] sm:$0xff]
  %v15 = vld [vmem:[%s0 + $0x20] sm:$0xff]
  %v16 = vld [vmem:[%s0 + $0x28] sm:$0x3f]
  %v17 = vld [vmem:[%s0 + $0x30] sm:$0xff]
  %v18 = vld [vmem:[%s0 + $0x38] sm:$0xff]
  %v19 = vld [vmem:[%s0 + $0x40] sm:$0x3f]
  %v20 = vld [vmem:[%s0 + $0x48] sm:$0xff]
  %v21 = vld [vmem:[%s0 + $0x50] sm:$0xff]
  %v22 = vld [vmem:[%s0 + $0x58] sm:$0x3f]
  %v23 = vld [vmem:[%s0 + $0x60] sm:$0xff]
  %v24 = vld [vmem:[%s0 + $0x68] sm:$0xff]
  %v25 = vld [vmem:[%s0 + $0x70] sm:$0x3f]
  %v26 = vld [vmem:[%s0 + $0x78] sm:$0xff]
  %v27 = vld [vmem:[%s0 + $0x80] sm:$0xff]
  %v28 = vld [vmem:[%s0 + $0x88] sm:$0x3f]
  %v29 = vld [vmem:[%s0 + $0x90] sm:$0xff]
  %v30 = vld [vmem:[%s0 + $0x98] sm:$0xff]
  %v31 = vld [vmem:[%s0 + $0xa0] sm:$0x3f]
  %v32 = vld [vmem:[%s0 + $0xa8] sm:$0xff]
  %v33 = vld [vmem:[%s0 + $0xb0] sm:$0xff]
  %v34 = vld [vmem:[%s0 + $0xb8] sm:$0x3f]
  %v35 = vld [vmem:[%s1] sm:$0xff]
  %v36 = vld [vmem:[%s1 + $0x8] sm:$0xff]
  %v37 = vld [vmem:[%s1 + $0x10] sm:$0x3f]
  %v38 = vld [vmem:[%s1 + $0x18] sm:$0xff]
  %v39 = vld [vmem:[%s1 + $0x20] sm:$0xff]
  %v40 = vld [vmem:[%s1 + $0x28] sm:$0x3f]
  %v41 = vld [vmem:[%s1 + $0x30] sm:$0xff]
  %v42 = vld [vmem:[%s1 + $0x38] sm:$0xff]
  %v43 = vld [vmem:[%s1 + $0x40] sm:$0x3f]
  %v44 = vld [vmem:[%s1 + $0x48] sm:$0xff]
  %v45 = vld [vmem:[%s1 + $0x50] sm:$0xff]
  %v46 = vld [vmem:[%s1 + $0x58] sm:$0x3f]
  %v47 = vld [vmem:[%s1 + $0x60] sm:$0xff]
  %v48 = vld [vmem:[%s1 + $0x68] sm:$0xff]
  %v49 = vld [vmem:[%s1 + $0x70] sm:$0x3f]
  %v50 = vld [vmem:[%s1 + $0x78] sm:$0xff]
  %v51 = vld [vmem:[%s1 + $0x80] sm:$0xff]
  %v52 = vld [vmem:[%s1 + $0x88] sm:$0x3f]
  %v53 = vld [vmem:[%s1 + $0x90] sm:$0xff]
  %v54 = vld [vmem:[%s1 + $0x98] sm:$0xff]
  %v55 = vld [vmem:[%s1 + $0xa0] sm:$0x3f]
  %v56 = vld [vmem:[%s1 + $0xa8] sm:$0xff]
  %v57 = vld [vmem:[%s1 + $0xb0] sm:$0xff]
  %v58 = vld [vmem:[%s1 + $0xb8] sm:$0x3f]
  %v59 = vld [vmem:[%s1 + $0xc0] sm:$0xff]
  %v60 = vld [vmem:[%s1 + $0xc8] sm:$0xff]
  %v61 = vld [vmem:[%s1 + $0xd0] sm:$0x3f]
  %v62 = vld [vmem:[%s1 + $0xd8] sm:$0xff]
  %v63 = vld [vmem:[%s1 + $0xe0] sm:$0xff]
  %v64 = vld [vmem:[%s1 + $0xe8] sm:$0x3f]
  %v65 = vld [vmem:[%s1 + $0xf0] sm:$0xff]
  %v66 = vld [vmem:[%s1 + $0xf8] sm:$0xff]
  %v67 = vld [vmem:[%s1 + $0x100] sm:$0x3f]
  %v68 = vld [vmem:[%s1 + $0x108] sm:$0xff]
  %v69 = vld [vmem:[%s1 + $0x110] sm:$0xff]
  %v70 = vld [vmem:[%s1 + $0x118] sm:$0x3f]
  %v71 = vld [vmem:[%s1 + $0x120] sm:$0xff]
  %v72 = vld [vmem:[%s1 + $0x128] sm:$0xff]
  %v73 = vld [vmem:[%s1 + $0x130] sm:$0x3f]
  %v74 = vld [vmem:[%s1 + $0x138] sm:$0xff]
  %v75 = vld [vmem:[%s1 + $0x140] sm:$0xff]
  %v76 = vld [vmem:[%s1 + $0x148] sm:$0x3f]
  %v77 = vld [vmem:[%s1 + $0x150] sm:$0xff]
  %v78 = vld [vmem:[%s1 + $0x158] sm:$0xff]
  %v79 = vld [vmem:[%s1 + $0x160] sm:$0x3f]
  %v80 = vld [vmem:[%s1 + $0x168] sm:$0xff]
  %v81 = vld [vmem:[%s1 + $0x170] sm:$0xff]
  %v82 = vld [vmem:[%s1 + $0x178] sm:$0x3f]
  %v83 = vmul.f32 %v11, %v35
  %v84 = vmul.f32 %v12, %v36
  %v85 = vmul.f32 %v13, %v37
  %v86 = vmul.f32 %v11, %v38
  %v87 = vmul.f32 %v12, %v39
  %v88 = vmul.f32 %v13, %v40
  %v89 = vmul.f32 %v11, %v41
  %v90 = vmul.f32 %v12, %v42
  %v91 = vmul.f32 %v13, %v43
  %v92 = vmul.f32 %v11, %v44
  %v93 = vmul.f32 %v12, %v45
  %v94 = vmul.f32 %v13, %v46
  %v95 = vmul.f32 %v23, %v35
  %v96 = vmul.f32 %v24, %v36
  %v97 = vmul.f32 %v25, %v37
  %v98 = vmul.f32 %v23, %v38
  %v99 = vmul.f32 %v24, %v39
  %v100 = vmul.f32 %v25, %v40
  %v101 = vmul.f32 %v23, %v41
  %v102 = vmul.f32 %v24, %v42
  %v103 = vmul.f32 %v25, %v43
  %v104 = vmul.f32 %v23, %v44
  %v105 = vmul.f32 %v24, %v45
  %v106 = vmul.f32 %v25, %v46
  %v107 = vmul.f32 %v14, %v47
  %v108 = vmul.f32 %v15, %v48
  %v109 = vmul.f32 %v16, %v49
  %v110 = vmul.f32 %v14, %v50
  %v111 = vmul.f32 %v15, %v51
  %v112 = vmul.f32 %v16, %v52
  %v113 = vmul.f32 %v14, %v53
  %v114 = vmul.f32 %v15, %v54
  %v115 = vmul.f32 %v16, %v55
  %v116 = vmul.f32 %v14, %v56
  %v117 = vmul.f32 %v15, %v57
  %v118 = vmul.f32 %v16, %v58
  %v119 = vmul.f32 %v26, %v47
  %v120 = vmul.f32 %v27, %v48
  %v121 = vmul.f32 %v28, %v49
  %v122 = vmul.f32 %v26, %v50
  %v123 = vmul.f32 %v27, %v51
  %v124 = vmul.f32 %v28, %v52
  %v125 = vmul.f32 %v26, %v53
  %v126 = vmul.f32 %v27, %v54
  %v127 = vmul.f32 %v28, %v55
  %v128 = vmul.f32 %v26, %v56
  %v129 = vmul.f32 %v27, %v57
  %v130 = vmul.f32 %v28, %v58
  %v131 = vadd.f32 %v83, %v107
  %v132 = vadd.f32 %v84, %v108
  %v133 = vadd.f32 %v85, %v109
  %v134 = vadd.f32 %v86, %v110
  %v135 = vadd.f32 %v87, %v111
  %v136 = vadd.f32 %v88, %v112
  %v137 = vadd.f32 %v89, %v113
  %v138 = vadd.f32 %v90, %v114
  %v139 = vadd.f32 %v91, %v115
  %v140 = vadd.f32 %v92, %v116
  %v141 = vadd.f32 %v93, %v117
  %v142 = vadd.f32 %v94, %v118
  %v143 = vadd.f32 %v95, %v119
  %v144 = vadd.f32 %v96, %v120
  %v145 = vadd.f32 %v97, %v121
  %v146 = vadd.f32 %v98, %v122
  %v147 = vadd.f32 %v99, %v123
  %v148 = vadd.f32 %v100, %v124
  %v149 = vadd.f32 %v101, %v125
  %v150 = vadd.f32 %v102, %v126
  %v151 = vadd.f32 %v103, %v127
  %v152 = vadd.f32 %v104, %v128
  %v153 = vadd.f32 %v105, %v129
  %v154 = vadd.f32 %v106, %v130
  %v155 = vmul.f32 %v17, %v59
  %v156 = vmul.f32 %v18, %v60
  %v157 = vmul.f32 %v19, %v61
  %v158 = vmul.f32 %v17, %v62
  %v159 = vmul.f32 %v18, %v63
  %v160 = vmul.f32 %v19, %v64
  %v161 = vmul.f32 %v17, %v65
  %v162 = vmul.f32 %v18, %v66
  %v163 = vmul.f32 %v19, %v67
  %v164 = vmul.f32 %v17, %v68
  %v165 = vmul.f32 %v18, %v69
  %v166 = vmul.f32 %v19, %v70
  %v167 = vmul.f32 %v29, %v59
  %v168 = vmul.f32 %v30, %v60
  %v169 = vmul.f32 %v31, %v61
  %v170 = vmul.f32 %v29, %v62
  %v171 = vmul.f32 %v30, %v63
  %v172 = vmul.f32 %v31, %v64
  %v173 = vmul.f32 %v29, %v65
  %v174 = vmul.f32 %v30, %v66
  %v175 = vmul.f32 %v31, %v67
  %v176 = vmul.f32 %v29, %v68
  %v177 = vmul.f32 %v30, %v69
  %v178 = vmul.f32 %v31, %v70
  %v179 = vadd.f32 %v131, %v155
  %v180 = vadd.f32 %v132, %v156
  %v181 = vadd.f32 %v133, %v157
  %v182 = vadd.f32 %v134, %v158
  %v183 = vadd.f32 %v135, %v159
  %v184 = vadd.f32 %v136, %v160
  %v185 = vadd.f32 %v137, %v161
  %v186 = vadd.f32 %v138, %v162
  %v187 = vadd.f32 %v139, %v163
  %v188 = vadd.f32 %v140, %v164
  %v189 = vadd.f32 %v141, %v165
  %v190 = vadd.f32 %v142, %v166
  %v191 = vadd.f32 %v143, %v167
  %v192 = vadd.f32 %v144, %v168
  %v193 = vadd.f32 %v145, %v169
  %v194 = vadd.f32 %v146, %v170
  %v195 = vadd.f32 %v147, %v171
  %v196 = vadd.f32 %v148, %v172
  %v197 = vadd.f32 %v149, %v173
  %v198 = vadd.f32 %v150, %v174
  %v199 = vadd.f32 %v151, %v175
  %v200 = vadd.f32 %v152, %v176
  %v201 = vadd.f32 %v153, %v177
  %v202 = vadd.f32 %v154, %v178
  %v203 = vmul.f32 %v20, %v71
  %v204 = vmul.f32 %v21, %v72
  %v205 = vmul.f32 %v22, %v73
  %v206 = vmul.f32 %v20, %v74
  %v207 = vmul.f32 %v21, %v75
  %v208 = vmul.f32 %v22, %v76
  %v209 = vmul.f32 %v20, %v77
  %v210 = vmul.f32 %v21, %v78
  %v211 = vmul.f32 %v22, %v79
  %v212 = vmul.f32 %v20, %v80
  %v213 = vmul.f32 %v21, %v81
  %v214 = vmul.f32 %v22, %v82
  %v215 = vmul.f32 %v32, %v71
  %v216 = vmul.f32 %v33, %v72
  %v217 = vmul.f32 %v34, %v73
  %v218 = vmul.f32 %v32, %v74
  %v219 = vmul.f32 %v33, %v75
  %v220 = vmul.f32 %v34, %v76
  %v221 = vmul.f32 %v32, %v77
  %v222 = vmul.f32 %v33, %v78
  %v223 = vmul.f32 %v34, %v79
  %v224 = vmul.f32 %v32, %v80
  %v225 = vmul.f32 %v33, %v81
  %v226 = vmul.f32 %v34, %v82
  %v227 = vadd.f32 %v179, %v203
  %v228 = vadd.f32 %v180, %v204
  %v229 = vadd.f32 %v181, %v205
  %v230 = vadd.f32 %v182, %v206
  %v231 = vadd.f32 %v183, %v207
  %v232 = vadd.f32 %v184, %v208
  %v233 = vadd.f32 %v185, %v209
  %v234 = vadd.f32 %v186, %v210
  %v235 = vadd.f32 %v187, %v211
  %v236 = vadd.f32 %v188, %v212
  %v237 = vadd.f32 %v189, %v213
  %v238 = vadd.f32 %v190, %v214
  %v239 = vadd.f32 %v191, %v215
  %v240 = vadd.f32 %v192, %v216
  %v241 = vadd.f32 %v193, %v217
  %v242 = vadd.f32 %v194, %v218
  %v243 = vadd.f32 %v195, %v219
  %v244 = vadd.f32 %v196, %v220
  %v245 = vadd.f32 %v197, %v221
  %v246 = vadd.f32 %v198, %v222
  %v247 = vadd.f32 %v199, %v223
  %v248 = vadd.f32 %v200, %v224
  %v249 = vadd.f32 %v201, %v225
  %v250 = vadd.f32 %v202, %v226
  %vm251 = vcmask 179200
  %252 = vst.msk [vmem:[%s2] sm:$0xff] %vm251, %v227
  %253 = vst.msk [vmem:[%s2 + $0x8] sm:$0xff] %vm251, %v228
  %vm254 = vcmask 177152
  %255 = vst.msk [vmem:[%s2 + $0x10] sm:$0x3f] %vm254, %v229
  %256 = vst.msk [vmem:[%s2 + $0x18] sm:$0xff] %vm251, %v230
  %257 = vst.msk [vmem:[%s2 + $0x20] sm:$0xff] %vm251, %v231
  %258 = vst.msk [vmem:[%s2 + $0x28] sm:$0x3f] %vm254, %v232
  %259 = vst.msk [vmem:[%s2 + $0x30] sm:$0xff] %vm251, %v233
  %260 = vst.msk [vmem:[%s2 + $0x38] sm:$0xff] %vm251, %v234
  %261 = vst.msk [vmem:[%s2 + $0x40] sm:$0x3f] %vm254, %v235
  %262 = vst.msk [vmem:[%s2 + $0x48] sm:$0xff] %vm251, %v236
  %263 = vst.msk [vmem:[%s2 + $0x50] sm:$0xff] %vm251, %v237
  %264 = vst.msk [vmem:[%s2 + $0x58] sm:$0x3f] %vm254, %v238
  %265 = vst.msk [vmem:[%s2 + $0x60] sm:$0xff] %vm251, %v239
  %266 = vst.msk [vmem:[%s2 + $0x68] sm:$0xff] %vm251, %v240
  %267 = vst.msk [vmem:[%s2 + $0x70] sm:$0x3f] %vm254, %v241
  %268 = vst.msk [vmem:[%s2 + $0x78] sm:$0xff] %vm251, %v242
  %269 = vst.msk [vmem:[%s2 + $0x80] sm:$0xff] %vm251, %v243
  %270 = vst.msk [vmem:[%s2 + $0x88] sm:$0x3f] %vm254, %v244
  %271 = vst.msk [vmem:[%s2 + $0x90] sm:$0xff] %vm251, %v245
  %272 = vst.msk [vmem:[%s2 + $0x98] sm:$0xff] %vm251, %v246
  %273 = vst.msk [vmem:[%s2 + $0xa0] sm:$0x3f] %vm254, %v247
  %274 = vst.msk [vmem:[%s2 + $0xa8] sm:$0xff] %vm251, %v248
  %275 = vst.msk [vmem:[%s2 + $0xb0] sm:$0xff] %vm251, %v249
  %276 = vst.msk [vmem:[%s2 + $0xb8] sm:$0x3f] %vm254, %v250
  // Predicated region
  $region10: #{a_call__.1} parent=0 // pred_check
    _
  $region11: #{a_call__.1} parent=0 // pred_check_branch
    %278 = sbr.rel (0) target = $region13
  $region12: #{a_call__.1} parent=0 // pred_region
    _
  $region13: #{a_call__.1} parent=0 // pred_fallthru
    _
  // Predicated region
  $region14: #{a_call__.1} parent=0 // pred_check
    _
  $region15: #{a_call__.1} parent=0 // pred_check_branch
    %280 = sbr.rel (0) target = $region17
  $region16: #{a_call__.1} parent=0 // pred_region
    _
  $region17: #{a_call__.1} parent=0 // pred_fallthru
    _

</llo_original>
